<compile_context>
chip_gen: v5e
topology: v5e:2x2
jax: 0.10.0
libtpu: 0.0.40
codegen_flags: <defaults>
</compile_context>

<pallas_src>
import jax
import jax.numpy as jnp
from jax.experimental import pallas as pl
from jax.experimental.pallas import tpu as pltpu


def _norm_kernel(scale_ref, bias_ref, x_ref, o_ref):
    # scale_ref / bias_ref: (row_tile, 1) f32 columns, broadcast across lanes.
    # x_ref / o_ref:        (row_tile, col_tile) lane-dense data tile.
    # Folded normalization: o = x * (1/std) + (-mean/std)  (one mul + one add).
    x = x_ref[...]
    o_ref[...] = (x * scale_ref[...] + bias_ref[...]).astype(o_ref.dtype)


def _row_align_for_dtype(dtype):
    # Sub-32-bit dtypes pack along sublanes: 8 rows/vreg for 4-byte, 16 for
    # 2-byte (bf16), 32 for 1-byte (int8/fp8).  Row tiles aligned to the packed
    # sublane count avoid relayout copies and half-empty vregs.
    itemsize = jnp.dtype(dtype).itemsize
    return {4: 8, 2: 16, 1: 32}.get(itemsize, 8)


def _pick_tile(total, align, target):
    """Block size <= min(total, target) that is either a multiple of `align`
    (partial edge blocks handled by a cdiv grid) or the full extent."""
    if total <= target:
        return total                       # full-extent block is always legal
    return max(align, (target // align) * align)


def norm_forward(x, mean, std):
    """x: [B, C, H, W]; mean/std: per-channel constants (C elements, any shape)."""
    B, C, H, W = x.shape
    rows, cols = B * C, H * W
    itemsize = jnp.dtype(x.dtype).itemsize

    # (x - m) / s  ==  x * (1/s) + (-m/s), computed once on tiny (C,) vectors.
    inv_std = 1.0 / jnp.asarray(std, jnp.float32).reshape(C)
    bias = -jnp.asarray(mean, jnp.float32).reshape(C) * inv_std
    scale_rows = jnp.broadcast_to(inv_std[None, :], (B, C)).reshape(rows, 1)
    bias_rows = jnp.broadcast_to(bias[None, :], (B, C)).reshape(rows, 1)

    # Lane-dense 2D view: rows = B*C image planes, cols = H*W pixels.
    x2 = x.reshape(rows, cols)

    # ~1-2 MiB blocks: near the HBM roofline plateau on v5e/v6e while staying
    # well inside v7x's 64 MiB VMEM (32 MiB scoped) with double buffering.
    row_align = _row_align_for_dtype(x.dtype)
    col_tile = _pick_tile(cols, 128, 4096)
    target_rows = max(row_align, (2 << 20) // max(1, col_tile * itemsize))
    row_tile = _pick_tile(rows, row_align, target_rows)

    # v7x megacore guard: a >1 MiB problem must produce >=2 grid blocks so both
    # TensorCores get work.  Split rows first (keeps lane-dense columns).
    total_bytes = rows * cols * itemsize
    if total_bytes > (1 << 20) and pl.cdiv(rows, row_tile) * pl.cdiv(cols, col_tile) < 2:
        if rows > row_align:
            row_tile = max(row_align, ((row_tile // 2) // row_align) * row_align)
        elif cols > 128:
            col_tile = max(128, ((col_tile // 2) // 128) * 128)

    # cdiv grid: partial edge blocks are fine and block footprints stay bounded.
    # NOTE: keep the column axis innermost and the scale/bias index_map at
    # (r, 0) -- their block index is then invariant across the inner axis and
    # Pallas elides the narrow (row_tile, 1) DMA on consecutive grid steps.
    grid = (pl.cdiv(rows, row_tile), pl.cdiv(cols, col_tile))

    data_spec = pl.BlockSpec((row_tile, col_tile), lambda r, c: (r, c))
    vec_spec = pl.BlockSpec((row_tile, 1), lambda r, c: (r, 0))

    out2 = pl.pallas_call(
        _norm_kernel,
        out_shape=jax.ShapeDtypeStruct((rows, cols), x.dtype),
        grid=grid,
        in_specs=[vec_spec, vec_spec, data_spec],
        out_specs=data_spec,
        compiler_params=pltpu.CompilerParams(
            dimension_semantics=("parallel", "parallel"),
            vmem_limit_bytes=32 * 1024 * 1024,  # explicit; safe on v5e/v6e/v7x
        ),
    )(scale_rows, bias_rows, x2)

    return out2.reshape(B, C, H, W)


def _reference(x, mean, std):
    m = jnp.asarray(mean, jnp.float32).reshape(1, len(mean), 1, 1).astype(x.dtype)
    s = jnp.asarray(std, jnp.float32).reshape(1, len(std), 1, 1).astype(x.dtype)
    return (x - m) / s


if __name__ == "__main__":
    # Module buffers: mean/std are (1, 3, 1, 1) per-channel constants.
    mean = [0.485, 0.456, 0.406]
    std = [0.229, 0.224, 0.225]

    key = jax.random.PRNGKey(0)

    # Primary small test (shape consistent with the module: C must be 3).
    x = jax.random.uniform(key, (2, 3, 16, 16), dtype=jnp.float32)
    out = jax.block_until_ready(norm_forward(x, mean, std))
    ref = _reference(x, mean, std)
    assert out.shape == x.shape and out.dtype == x.dtype
    assert jnp.allclose(out, ref, atol=1e-5, rtol=1e-5), float(jnp.max(jnp.abs(out - ref)))

    # Secondary test exercising the cdiv grid with a partial edge column block.
    x2 = jax.random.uniform(jax.random.PRNGKey(1), (4, 3, 224, 224), dtype=jnp.float32)
    out2 = jax.block_until_ready(norm_forward(x2, mean, std))
    ref2 = _reference(x2, mean, std)
    assert out2.shape == x2.shape and out2.dtype == x2.dtype
    assert jnp.allclose(out2, ref2, atol=1e-5, rtol=1e-5), float(jnp.max(jnp.abs(out2 - ref2)))

    print("KERNEL_OK")
</pallas_src>

<mosaic_0001>
module attributes {stable_mosaic.version = 11 : i64} {
  func.func @_norm_kernel(%arg0: i32, %arg1: i32, %arg2: memref<6x1xf32, #tpu.memory_space<vmem>>, %arg3: memref<6x1xf32, #tpu.memory_space<vmem>>, %arg4: memref<6x256xf32, #tpu.memory_space<vmem>>, %arg5: memref<6x256xf32, #tpu.memory_space<vmem>>) attributes {dimension_semantics = [#tpu.dimension_semantics<parallel>, #tpu.dimension_semantics<parallel>], iteration_bounds = array<i64: 1, 1>, scalar_prefetch = 0 : i64, scratch_operands = 0 : i64, tpu.core_type = #tpu.core_type<tc>, window_params = [{transform_indices = @transform_0, window_bounds = array<i64: 6, 1>}, {transform_indices = @transform_1, window_bounds = array<i64: 6, 1>}, {transform_indices = @transform_2, window_bounds = array<i64: 6, 256>}, {transform_indices = @transform_3, window_bounds = array<i64: 6, 256>}]} {
    %c0 = arith.constant 0 : index
    %c0_0 = arith.constant 0 : index
    %0 = vector.load %arg4[%c0, %c0_0] : memref<6x256xf32, #tpu.memory_space<vmem>>, vector<6x256xf32>
    %c0_1 = arith.constant 0 : index
    %c0_2 = arith.constant 0 : index
    %1 = vector.load %arg2[%c0_1, %c0_2] : memref<6x1xf32, #tpu.memory_space<vmem>>, vector<6x1xf32>
    %2 = vector.broadcast %1 : vector<6x1xf32> to vector<6x256xf32>
    %3 = arith.mulf %0, %2 : vector<6x256xf32>
    %c0_3 = arith.constant 0 : index
    %c0_4 = arith.constant 0 : index
    %4 = vector.load %arg3[%c0_3, %c0_4] : memref<6x1xf32, #tpu.memory_space<vmem>>, vector<6x1xf32>
    %5 = vector.broadcast %4 : vector<6x1xf32> to vector<6x256xf32>
    %6 = arith.addf %3, %5 : vector<6x256xf32>
    %c0_5 = arith.constant 0 : index
    %c0_6 = arith.constant 0 : index
    %7 = vector.load %arg5[%c0_5, %c0_6] : memref<6x256xf32, #tpu.memory_space<vmem>>, vector<6x256xf32>
    tpu.vector_store %arg5[%c0_5, %c0_6], %6 {strides = array<i32>} : memref<6x256xf32, #tpu.memory_space<vmem>>, vector<6x256xf32>,
    return
  }
  func.func @transform_0(%arg0: i32, %arg1: i32) -> (i32, i32) {
    %c0_i32 = arith.constant 0 : i32
    %c0_i32_0 = arith.constant 0 : i32
    return %arg0, %c0_i32 : i32, i32
  }
  func.func @transform_1(%arg0: i32, %arg1: i32) -> (i32, i32) {
    %c0_i32 = arith.constant 0 : i32
    %c0_i32_0 = arith.constant 0 : i32
    return %arg0, %c0_i32 : i32, i32
  }
  func.func @transform_2(%arg0: i32, %arg1: i32) -> (i32, i32) {
    %c0_i32 = arith.constant 0 : i32
    return %arg0, %arg1 : i32, i32
  }
  func.func @transform_3(%arg0: i32, %arg1: i32) -> (i32, i32) {
    %c0_i32 = arith.constant 0 : i32
    return %arg0, %arg1 : i32, i32
  }
}

</mosaic_0001>

<llo_original>
// kernel: tpu_custom_call.1
$region0: #{tpu_custom_call.1}
  #allocation0 [shape = 'u32[]', space=smem, size = 0x4, offset = 0x4, fixed_abs, tag = 'smem constant byte address 0x4 - core index']
  #allocation1 [shape = 'u32[72,128]{1,0:T(1,128)}', space=vmem, size = 0x9000, scoped, tag = 'internal scratch']
  %s0 = inlined_call_operand.vmem [shape: f32[6,1], index: 0, kind: input, shape index: {}]
  %s1 = inlined_call_operand.vmem [shape: f32[6,1], index: 1, kind: input, shape index: {}]
  %s2 = inlined_call_operand.vmem [shape: f32[6,256], index: 2, kind: input, shape index: {}]
  %s3 = inlined_call_operand.hbm [shape: f32[6,256], index: 3, kind: output, shape index: {}]
  %s4 = sld [smem:[#allocation0]]
  $region22: #{tpu_custom_call.1} parent=0
    _
  %s6 = ssub.s32 1, %s4
  %s7 = scalar_select 0, %s6, %s4
  $region1: #{tpu_custom_call.1} parent=0
    #allocation2 [shape = 'u8[8192]{0}', space=vmem, size = 0x2000, scoped, tag = 'output window, operand 0, single buffered']
    #allocation3 [shape = 's32[1]{0}', space=sflag, size = 0x4, scoped, tag = 'scoped memory for tpu_custom_call.1']
    %8 = vsyncpa [#allocation3], 0
    // Predicated region
    $region2: #{tpu_custom_call.1} parent=1 // pred_check
      _
    $region3: #{tpu_custom_call.1} parent=1 // pred_check_branch
      %10 = sbr.rel (0) target = $region5
    $region4: #{tpu_custom_call.1} parent=1 // pred_region
      _
    $region5: #{tpu_custom_call.1} parent=1 // pred_fallthru
      _
    // Predicated region
    $region6: #{tpu_custom_call.1} parent=1 // pred_check
      _
    $region7: #{tpu_custom_call.1} parent=1 // pred_check_branch
      %12 = sbr.rel (0) target = $region9
    $region8: #{tpu_custom_call.1} parent=1 // pred_region
      _
    $region9: #{tpu_custom_call.1} parent=1 // pred_fallthru
      _
    // Predicated region
    $region10: #{tpu_custom_call.1} parent=1 // pred_check
      _
    $region11: #{tpu_custom_call.1} parent=1 // pred_check_branch
      %14 = sbr.rel (0) target = $region13
    $region12: #{tpu_custom_call.1} parent=1 // pred_region
      _
    $region13: #{tpu_custom_call.1} parent=1 // pred_fallthru
      _
    %v15 = vld [vmem:[%s2] sm:$0x3f]
    %v16 = vld [vmem:[%s2 + $0x8] sm:$0x3f]
    %v17 = vld [vmem:[%s0] sm:$0x3f]
    %19 = vset.pattern.permute.xlu0 0
    %20 = vperm.xlu0 %19, %v17
    %v21 = vpop.permute.xlu0 %20
    %v23 = vmul.f32 %v15, %v21
    %v24 = vmul.f32 %v16, %v21
    %v25 = vld [vmem:[%s1] sm:$0x3f]
    %27 = vset.pattern.permute.xlu0 0
    %28 = vperm.xlu0 %27, %v25
    %v29 = vpop.permute.xlu0 %28
    %v31 = vadd.f32 %v23, %v29
    %v32 = vadd.f32 %v24, %v29
    %33 = vst [vmem:[#allocation2] sm:$0x3f] %v31
    %34 = vst [vmem:[#allocation2 + $0x8] sm:$0x3f] %v32
    // Predicated region
    $region14: #{tpu_custom_call.1} parent=1 // pred_check
      _
    $region15: #{tpu_custom_call.1} parent=1 // pred_check_branch
      %36 = sbr.rel (0) target = $region17
    $region16: #{tpu_custom_call.1} parent=1 // pred_region
      %38 = vsyncadd [#allocation3], 0
      %s40 = sshll.u32 [#allocation2], 4
      %s41 = int_to_ptr.vmem [resolvable:$true] %s40
      %s42 = sshll.u32 %s3, 4
      %s43 = int_to_ptr.hbm [resolvable:$true] %s42
      %45 = dma.vmem_to_hbm [thread:$0]  %s41, 256, %s43, [#allocation3]
    $region17: #{tpu_custom_call.1} parent=1 // pred_fallthru
      _
    // Predicated region
    $region18: #{tpu_custom_call.1} parent=1 // pred_check
      _
    $region19: #{tpu_custom_call.1} parent=1 // pred_check_branch
      %47 = sbr.rel (0) target = $region21
    $region20: #{tpu_custom_call.1} parent=1 // pred_region
      %49 = dma.done [#allocation3], 256
    $region21: #{tpu_custom_call.1} parent=1 // pred_fallthru
      _
    %50 = vsyncpa [#allocation3], 1

</llo_original>
